<compile_context>
chip_gen: v5e
topology: v5e:2x2
jax: 0.10.0
libtpu: 0.0.40
codegen_flags: <defaults>
</compile_context>

<pallas_src>
import functools

import jax
import jax.numpy as jnp
from jax import lax
from jax.experimental import pallas as pl
from jax.experimental.pallas import tpu as pltpu

# Hidden sizes from the module defaults (h1..h4).
H1, H2, H3, H4 = 16, 32, 64, 128


def _mlp_kernel(x_ref,
                w1_ref, b1_ref,
                w2_ref, b2_ref,
                w3_ref, b3_ref,
                w4_ref, b4_ref,
                w5p_ref, b5p_ref,
                out_ref,
                *, use_bf16=False):
    """Fused MLP + folded regression head on one node tile.

    x_ref is node-major (tm, in_features); weights are torch layout (out, in);
    biases are (out, 1); w5p is the folded (1, H4) head.  Activations run
    feature-major (features, tm) so the result is a lane-dense (1, tm) row.
    """
    op_dtype = jnp.bfloat16 if use_bf16 else jnp.float32

    def mm(w, h):
        # (out, k) @ (k, tm) -> (out, tm), f32 accumulation on the MXU.
        return lax.dot_general(
            w.astype(op_dtype), h.astype(op_dtype),
            dimension_numbers=(((1,), (0,)), ((), ())),
            preferred_element_type=jnp.float32)

    x = x_ref[...]                                           # (tm, in)

    # Layer 1: contract the shared feature axis of node-major x:
    # (H1, in) x (tm, in) -> (H1, tm).
    h = lax.dot_general(
        w1_ref[...].astype(op_dtype), x.astype(op_dtype),
        dimension_numbers=(((1,), (1,)), ((), ())),
        preferred_element_type=jnp.float32) + b1_ref[...]
    h = jnp.maximum(h, 0.0)

    h = jnp.maximum(mm(w2_ref[...], h) + b2_ref[...], 0.0)   # (H2, tm)
    h = jnp.maximum(mm(w3_ref[...], h) + b3_ref[...], 0.0)   # (H3, tm)
    h = jnp.maximum(mm(w4_ref[...], h) + b4_ref[...], 0.0)   # (H4, tm)

    # Folded Linear(H4, out) + Linear(out, 1, bias=False): one (1, H4) matvec.
    out_ref[...] = mm(w5p_ref[...], h) + b5p_ref[...]        # (1, tm)


def _pick_tm(n):
    """Node-tile size: multiple of 128 (lane-dense output row), capped at 2048,
    sized so large N keeps >= ~4 grid steps (megacore sharding / pipelining)."""
    tm = ((n + 4 * 128 - 1) // (4 * 128)) * 128
    return int(min(2048, max(128, tm)))


@functools.partial(jax.jit, static_argnames=("tm", "use_bf16"))
def node_embedding_model(x, params, *, tm=None, use_bf16=False):
    """x: (N, node_in_features) float32. Returns (N, 1, 1) like the torch module."""
    n, in_features = x.shape
    if tm is None:
        tm = _pick_tm(n)
    (w1, b1), (w2, b2), (w3, b3), (w4, b4), (w5, b5), wr = params

    # Fold the last Linear and the biasless head: exact in real arithmetic.
    w5p = wr.T @ w5                       # (1, H4)
    b5p = wr.T @ b5                       # (1, 1)

    full = lambda a: pl.BlockSpec(a.shape, lambda i, nd=a.ndim: (0,) * nd)

    out_features = w5.shape[0]
    flops = 2 * n * (in_features * H1 + H1 * H2 + H2 * H3 + H3 * H4 + H4 * 1)
    param_bytes = 4 * sum(int(a.size) for a in
                          (w1, b1, w2, b2, w3, b3, w4, b4, w5p, b5p))
    bytes_accessed = n * (in_features + 1) * 4 + param_bytes

    kernel = functools.partial(_mlp_kernel, use_bf16=use_bf16)

    y_row = pl.pallas_call(
        kernel,
        out_shape=jax.ShapeDtypeStruct((1, n), jnp.float32),
        grid_spec=pl.GridSpec(
            grid=(pl.cdiv(n, tm),),
            in_specs=[
                # Node-major tile; last dim == full dim so (8,128) rule holds.
                pl.BlockSpec((tm, in_features), lambda i: (i, 0)),
                full(w1), full(b1),
                full(w2), full(b2),
                full(w3), full(b3),
                full(w4), full(b4),
                full(w5p), full(b5p),
            ],
            out_specs=pl.BlockSpec((1, tm), lambda i: (0, i)),   # lane-dense row
        ),
        compiler_params=pltpu.CompilerParams(
            dimension_semantics=("parallel",)),
        cost_estimate=pl.CostEstimate(
            flops=flops, transcendentals=0, bytes_accessed=bytes_accessed),
    )(x, w1, b1, w2, b2, w3, b3, w4, b4, w5p, b5p)

    # unsqueeze(dim=1): (N,) -> (N, 1, 1), matching the torch output shape.
    del out_features
    return y_row[0, :].reshape(n, 1, 1)


def init_params(key, node_in_features, node_out_features):
    """PyTorch-style layouts: weights (out, in); biases (out, 1); head (out, 1)."""
    dims = [(node_in_features, H1), (H1, H2), (H2, H3), (H3, H4),
            (H4, node_out_features)]
    params = []
    for (din, dout) in dims:
        key, kw, kb = jax.random.split(key, 3)
        scale = 1.0 / jnp.sqrt(din)
        w = jax.random.uniform(kw, (dout, din), jnp.float32, -scale, scale)
        b = jax.random.uniform(kb, (dout, 1), jnp.float32, -scale, scale)
        params.append((w, b))
    key, kr = jax.random.split(key)
    scale = 1.0 / jnp.sqrt(node_out_features)
    wr = jax.random.uniform(kr, (node_out_features, 1), jnp.float32, -scale, scale)
    params.append(wr)
    return tuple(params)


def _reference(x, params):
    """Un-folded pure-JAX reference mirroring the torch module layer by layer."""
    (w1, b1), (w2, b2), (w3, b3), (w4, b4), (w5, b5), wr = params
    h = jnp.maximum(x @ w1.T + b1.T, 0.0)
    h = jnp.maximum(h @ w2.T + b2.T, 0.0)
    h = jnp.maximum(h @ w3.T + b3.T, 0.0)
    h = jnp.maximum(h @ w4.T + b4.T, 0.0)
    emb = h @ w5.T + b5.T
    return (emb @ wr)[:, None, :]                                  # (N, 1, 1)


if __name__ == "__main__":
    key = jax.random.PRNGKey(0)
    node_in_features = 8
    node_out_features = 32

    kx1, kx2, kp = jax.random.split(key, 3)
    params = init_params(kp, node_in_features, node_out_features)

    # Small case: N deliberately NOT a multiple of the tile size (ragged tail).
    n_small = 19
    x_small = jax.random.normal(kx1, (n_small, node_in_features), jnp.float32)
    y_small = node_embedding_model(x_small, params)
    jax.block_until_ready(y_small)
    y_small_ref = _reference(x_small, params)
    assert y_small.shape == (n_small, 1, 1), y_small.shape
    assert jnp.allclose(y_small, y_small_ref, atol=1e-4, rtol=1e-4), \
        float(jnp.max(jnp.abs(y_small - y_small_ref)))

    # Larger case: exercises a multi-step grid + ragged last block.
    n_big = 1500
    x_big = jax.random.normal(kx2, (n_big, node_in_features), jnp.float32)
    y_big = node_embedding_model(x_big, params)
    jax.block_until_ready(y_big)
    y_big_ref = _reference(x_big, params)
    assert y_big.shape == (n_big, 1, 1), y_big.shape
    assert jnp.allclose(y_big, y_big_ref, atol=1e-4, rtol=1e-4), \
        float(jnp.max(jnp.abs(y_big - y_big_ref)))

    # Optional bf16-operand path (v6e/v7x MXU width): smoke test only — bf16
    # operand rounding makes a tight tolerance inappropriate.
    y_bf16 = node_embedding_model(x_big, params, use_bf16=True)
    jax.block_until_ready(y_bf16)
    assert y_bf16.shape == (n_big, 1, 1), y_bf16.shape
    assert bool(jnp.all(jnp.isfinite(y_bf16)))

    print("KERNEL_OK")
</pallas_src>

<mosaic_0001>
module attributes {stable_mosaic.version = 11 : i64} {
  func.func @_mlp_kernel(%arg0: i32, %arg1: memref<128x8xf32, #tpu.memory_space<vmem>>, %arg2: memref<16x8xf32, #tpu.memory_space<vmem>>, %arg3: memref<16x1xf32, #tpu.memory_space<vmem>>, %arg4: memref<32x16xf32, #tpu.memory_space<vmem>>, %arg5: memref<32x1xf32, #tpu.memory_space<vmem>>, %arg6: memref<64x32xf32, #tpu.memory_space<vmem>>, %arg7: memref<64x1xf32, #tpu.memory_space<vmem>>, %arg8: memref<128x64xf32, #tpu.memory_space<vmem>>, %arg9: memref<128x1xf32, #tpu.memory_space<vmem>>, %arg10: memref<1x128xf32, #tpu.memory_space<vmem>>, %arg11: memref<1x1xf32, #tpu.memory_space<vmem>>, %arg12: memref<1x128xf32, #tpu.memory_space<vmem>>) attributes {dimension_semantics = [#tpu.dimension_semantics<parallel>], iteration_bounds = array<i64: 1>, scalar_prefetch = 0 : i64, scratch_operands = 0 : i64, tpu.core_type = #tpu.core_type<tc>, window_params = [{transform_indices = @transform_0, window_bounds = array<i64: 128, 8>}, {pipeline_mode = #tpu.pipeline_mode<synchronous>, transform_indices = @transform_1, window_bounds = array<i64: 16, 8>}, {pipeline_mode = #tpu.pipeline_mode<synchronous>, transform_indices = @transform_2, window_bounds = array<i64: 16, 1>}, {pipeline_mode = #tpu.pipeline_mode<synchronous>, transform_indices = @transform_3, window_bounds = array<i64: 32, 16>}, {pipeline_mode = #tpu.pipeline_mode<synchronous>, transform_indices = @transform_4, window_bounds = array<i64: 32, 1>}, {pipeline_mode = #tpu.pipeline_mode<synchronous>, transform_indices = @transform_5, window_bounds = array<i64: 64, 32>}, {pipeline_mode = #tpu.pipeline_mode<synchronous>, transform_indices = @transform_6, window_bounds = array<i64: 64, 1>}, {pipeline_mode = #tpu.pipeline_mode<synchronous>, transform_indices = @transform_7, window_bounds = array<i64: 128, 64>}, {pipeline_mode = #tpu.pipeline_mode<synchronous>, transform_indices = @transform_8, window_bounds = array<i64: 128, 1>}, {pipeline_mode = #tpu.pipeline_mode<synchronous>, transform_indices = @transform_9, window_bounds = array<i64: 1, 128>}, {pipeline_mode = #tpu.pipeline_mode<synchronous>, transform_indices = @transform_10, window_bounds = array<i64: 1, 1>}, {transform_indices = @transform_11, window_bounds = array<i64: 1, 128>}]} {
    %c0 = arith.constant 0 : index
    %c0_0 = arith.constant 0 : index
    %0 = vector.load %arg1[%c0, %c0_0] : memref<128x8xf32, #tpu.memory_space<vmem>>, vector<128x8xf32>
    %c0_1 = arith.constant 0 : index
    %c0_2 = arith.constant 0 : index
    %1 = vector.load %arg2[%c0_1, %c0_2] : memref<16x8xf32, #tpu.memory_space<vmem>>, vector<16x8xf32>
    %cst = arith.constant dense<0.000000e+00> : vector<16x128xf32>
    %2 = tpu.matmul %1, %0, %cst {dimension_numbers = #tpu.dot_dimension_numbers<[1], [1], [0], [0], [0, 0, 1, 0], [], []>} : vector<16x8xf32>, vector<128x8xf32>, vector<16x128xf32> -> vector<16x128xf32>
    %c0_3 = arith.constant 0 : index
    %c0_4 = arith.constant 0 : index
    %3 = vector.load %arg3[%c0_3, %c0_4] : memref<16x1xf32, #tpu.memory_space<vmem>>, vector<16x1xf32>
    %4 = vector.broadcast %3 : vector<16x1xf32> to vector<16x128xf32>
    %5 = arith.addf %2, %4 : vector<16x128xf32>
    %cst_5 = arith.constant 0.000000e+00 : f32
    %6 = vector.broadcast %cst_5 : f32 to vector<16x128xf32>
    %7 = arith.maximumf %5, %6 : vector<16x128xf32>
    %c0_6 = arith.constant 0 : index
    %c0_7 = arith.constant 0 : index
    %8 = vector.load %arg4[%c0_6, %c0_7] : memref<32x16xf32, #tpu.memory_space<vmem>>, vector<32x16xf32>
    %cst_8 = arith.constant dense<0.000000e+00> : vector<32x128xf32>
    %9 = tpu.matmul %8, %7, %cst_8 {dimension_numbers = #tpu.dot_dimension_numbers<[1], [0], [0], [1], [0, 0, 1, 1], [], []>} : vector<32x16xf32>, vector<16x128xf32>, vector<32x128xf32> -> vector<32x128xf32>
    %c0_9 = arith.constant 0 : index
    %c0_10 = arith.constant 0 : index
    %10 = vector.load %arg5[%c0_9, %c0_10] : memref<32x1xf32, #tpu.memory_space<vmem>>, vector<32x1xf32>
    %11 = vector.broadcast %10 : vector<32x1xf32> to vector<32x128xf32>
    %12 = arith.addf %9, %11 : vector<32x128xf32>
    %cst_11 = arith.constant 0.000000e+00 : f32
    %13 = vector.broadcast %cst_11 : f32 to vector<32x128xf32>
    %14 = arith.maximumf %12, %13 : vector<32x128xf32>
    %c0_12 = arith.constant 0 : index
    %c0_13 = arith.constant 0 : index
    %15 = vector.load %arg6[%c0_12, %c0_13] : memref<64x32xf32, #tpu.memory_space<vmem>>, vector<64x32xf32>
    %cst_14 = arith.constant dense<0.000000e+00> : vector<64x128xf32>
    %16 = tpu.matmul %15, %14, %cst_14 {dimension_numbers = #tpu.dot_dimension_numbers<[1], [0], [0], [1], [0, 0, 1, 1], [], []>} : vector<64x32xf32>, vector<32x128xf32>, vector<64x128xf32> -> vector<64x128xf32>
    %c0_15 = arith.constant 0 : index
    %c0_16 = arith.constant 0 : index
    %17 = vector.load %arg7[%c0_15, %c0_16] : memref<64x1xf32, #tpu.memory_space<vmem>>, vector<64x1xf32>
    %18 = vector.broadcast %17 : vector<64x1xf32> to vector<64x128xf32>
    %19 = arith.addf %16, %18 : vector<64x128xf32>
    %cst_17 = arith.constant 0.000000e+00 : f32
    %20 = vector.broadcast %cst_17 : f32 to vector<64x128xf32>
    %21 = arith.maximumf %19, %20 : vector<64x128xf32>
    %c0_18 = arith.constant 0 : index
    %c0_19 = arith.constant 0 : index
    %22 = vector.load %arg8[%c0_18, %c0_19] : memref<128x64xf32, #tpu.memory_space<vmem>>, vector<128x64xf32>
    %cst_20 = arith.constant dense<0.000000e+00> : vector<128x128xf32>
    %23 = tpu.matmul %22, %21, %cst_20 {dimension_numbers = #tpu.dot_dimension_numbers<[1], [0], [0], [1], [0, 0, 1, 1], [], []>} : vector<128x64xf32>, vector<64x128xf32>, vector<128x128xf32> -> vector<128x128xf32>
    %c0_21 = arith.constant 0 : index
    %c0_22 = arith.constant 0 : index
    %24 = vector.load %arg9[%c0_21, %c0_22] : memref<128x1xf32, #tpu.memory_space<vmem>>, vector<128x1xf32>
    %25 = vector.broadcast %24 : vector<128x1xf32> to vector<128x128xf32>
    %26 = arith.addf %23, %25 : vector<128x128xf32>
    %cst_23 = arith.constant 0.000000e+00 : f32
    %27 = vector.broadcast %cst_23 : f32 to vector<128x128xf32>
    %28 = arith.maximumf %26, %27 : vector<128x128xf32>
    %c0_24 = arith.constant 0 : index
    %c0_25 = arith.constant 0 : index
    %29 = vector.load %arg10[%c0_24, %c0_25] : memref<1x128xf32, #tpu.memory_space<vmem>>, vector<1x128xf32>
    %cst_26 = arith.constant dense<0.000000e+00> : vector<1x128xf32>
    %30 = tpu.matmul %29, %28, %cst_26 {dimension_numbers = #tpu.dot_dimension_numbers<[1], [0], [0], [1], [0, 0, 1, 1], [], []>} : vector<1x128xf32>, vector<128x128xf32>, vector<1x128xf32> -> vector<1x128xf32>
    %c0_27 = arith.constant 0 : index
    %c0_28 = arith.constant 0 : index
    %31 = vector.load %arg11[%c0_27, %c0_28] : memref<1x1xf32, #tpu.memory_space<vmem>>, vector<1x1xf32>
    %32 = vector.broadcast %31 : vector<1x1xf32> to vector<1x128xf32>
    %33 = arith.addf %30, %32 : vector<1x128xf32>
    %c0_29 = arith.constant 0 : index
    %c0_30 = arith.constant 0 : index
    %34 = vector.load %arg12[%c0_29, %c0_30] : memref<1x128xf32, #tpu.memory_space<vmem>>, vector<1x128xf32>
    tpu.vector_store %arg12[%c0_29, %c0_30], %33 {strides = array<i32>} : memref<1x128xf32, #tpu.memory_space<vmem>>, vector<1x128xf32>,
    return
  }
  func.func @transform_0(%arg0: i32) -> (i32, i32) {
    %c0_i32 = arith.constant 0 : i32
    %c0_i32_0 = arith.constant 0 : i32
    return %arg0, %c0_i32 : i32, i32
  }
  func.func @transform_1(%arg0: i32) -> (i32, i32) {
    %c0_i32 = arith.constant 0 : i32
    %c0_i32_0 = arith.constant 0 : i32
    %c0_i32_1 = arith.constant 0 : i32
    return %c0_i32, %c0_i32_0 : i32, i32
  }
  func.func @transform_2(%arg0: i32) -> (i32, i32) {
    %c0_i32 = arith.constant 0 : i32
    %c0_i32_0 = arith.constant 0 : i32
    %c0_i32_1 = arith.constant 0 : i32
    return %c0_i32, %c0_i32_0 : i32, i32
  }
  func.func @transform_3(%arg0: i32) -> (i32, i32) {
    %c0_i32 = arith.constant 0 : i32
    %c0_i32_0 = arith.constant 0 : i32
    %c0_i32_1 = arith.constant 0 : i32
    return %c0_i32, %c0_i32_0 : i32, i32
  }
  func.func @transform_4(%arg0: i32) -> (i32, i32) {
    %c0_i32 = arith.constant 0 : i32
    %c0_i32_0 = arith.constant 0 : i32
    %c0_i32_1 = arith.constant 0 : i32
    return %c0_i32, %c0_i32_0 : i32, i32
  }
  func.func @transform_5(%arg0: i32) -> (i32, i32) {
    %c0_i32 = arith.constant 0 : i32
    %c0_i32_0 = arith.constant 0 : i32
    %c0_i32_1 = arith.constant 0 : i32
    return %c0_i32, %c0_i32_0 : i32, i32
  }
  func.func @transform_6(%arg0: i32) -> (i32, i32) {
    %c0_i32 = arith.constant 0 : i32
    %c0_i32_0 = arith.constant 0 : i32
    %c0_i32_1 = arith.constant 0 : i32
    return %c0_i32, %c0_i32_0 : i32, i32
  }
  func.func @transform_7(%arg0: i32) -> (i32, i32) {
    %c0_i32 = arith.constant 0 : i32
    %c0_i32_0 = arith.constant 0 : i32
    %c0_i32_1 = arith.constant 0 : i32
    return %c0_i32, %c0_i32_0 : i32, i32
  }
  func.func @transform_8(%arg0: i32) -> (i32, i32) {
    %c0_i32 = arith.constant 0 : i32
    %c0_i32_0 = arith.constant 0 : i32
    %c0_i32_1 = arith.constant 0 : i32
    return %c0_i32, %c0_i32_0 : i32, i32
  }
  func.func @transform_9(%arg0: i32) -> (i32, i32) {
    %c0_i32 = arith.constant 0 : i32
    %c0_i32_0 = arith.constant 0 : i32
    %c0_i32_1 = arith.constant 0 : i32
    return %c0_i32, %c0_i32_0 : i32, i32
  }
  func.func @transform_10(%arg0: i32) -> (i32, i32) {
    %c0_i32 = arith.constant 0 : i32
    %c0_i32_0 = arith.constant 0 : i32
    %c0_i32_1 = arith.constant 0 : i32
    return %c0_i32, %c0_i32_0 : i32, i32
  }
  func.func @transform_11(%arg0: i32) -> (i32, i32) {
    %c0_i32 = arith.constant 0 : i32
    %c0_i32_0 = arith.constant 0 : i32
    return %c0_i32, %arg0 : i32, i32
  }
}

</mosaic_0001>

<llo_original>
// kernel: node_embedding_model.1
$region0: #{node_embedding_model.1}
  #allocation0 [shape = 'u32[]', space=smem, size = 0x4, offset = 0x4, fixed_abs, tag = 'smem constant byte address 0x4 - core index']
  #allocation1 [shape = 'u32[72,128]{1,0:T(1,128)}', space=vmem, size = 0x9000, scoped, tag = 'internal scratch']
  #allocation2 [shape = 'f32[1,1]{1,0:T(1,128)S(1)}', space=vmem, size = 0x200, scoped, tag = 'scoped memory for node_embedding_model.1']
  %s0 = inlined_call_operand.vmem [shape: f32[19,8], index: 0, kind: input, shape index: {}]
  %s1 = inlined_call_operand.vmem [shape: f32[16,8], index: 1, kind: input, shape index: {}]
  %s2 = inlined_call_operand.vmem [shape: f32[16,1], index: 2, kind: input, shape index: {}]
  %s3 = inlined_call_operand.vmem [shape: f32[32,16], index: 3, kind: input, shape index: {}]
  %s4 = inlined_call_operand.vmem [shape: f32[32,1], index: 4, kind: input, shape index: {}]
  %s5 = inlined_call_operand.vmem [shape: f32[64,32], index: 5, kind: input, shape index: {}]
  %s6 = inlined_call_operand.vmem [shape: f32[64,1], index: 6, kind: input, shape index: {}]
  %s7 = inlined_call_operand.vmem [shape: f32[128,64], index: 7, kind: input, shape index: {}]
  %s8 = inlined_call_operand.vmem [shape: f32[128,1], index: 8, kind: input, shape index: {}]
  %s9 = inlined_call_operand.vmem [shape: f32[1,128], index: 9, kind: input, shape index: {}]
  %s10 = inlined_call_operand.<no memory space> [shape: f32[1,1], index: 10, kind: input, shape index: {}]
  %s11 = inlined_call_operand.hbm [shape: f32[1,19], index: 11, kind: output, shape index: {}]
  %s12 = sld [smem:[#allocation0]]
  $region54: #{node_embedding_model.1} parent=0
    _
  %s14 = ssub.s32 1, %s12
  %s15 = scalar_select 0, %s14, %s12
  %v16 = vstv %s10
  %17 = vst [vmem:[#allocation2] sm:$0x1] %v16
  $region1: #{node_embedding_model.1} parent=0
    #allocation3 [shape = 'u8[512]{0}', space=vmem, size = 0x400, scoped, tag = 'output window, operand 0, single buffered']
    #allocation4 [shape = 's32[1]{0}', space=sflag, size = 0x4, scoped, tag = 'scoped memory for node_embedding_model.1']
    %18 = vsyncpa [#allocation4], 0
    // Predicated region
    $region2: #{node_embedding_model.1} parent=1 // pred_check
      _
    $region3: #{node_embedding_model.1} parent=1 // pred_check_branch
      %20 = sbr.rel (0) target = $region5
    $region4: #{node_embedding_model.1} parent=1 // pred_region
      _
    $region5: #{node_embedding_model.1} parent=1 // pred_fallthru
      _
    // Predicated region
    $region6: #{node_embedding_model.1} parent=1 // pred_check
      _
    $region7: #{node_embedding_model.1} parent=1 // pred_check_branch
      %22 = sbr.rel (0) target = $region9
    $region8: #{node_embedding_model.1} parent=1 // pred_region
      _
    $region9: #{node_embedding_model.1} parent=1 // pred_fallthru
      _
    // Predicated region
    $region10: #{node_embedding_model.1} parent=1 // pred_check
      _
    $region11: #{node_embedding_model.1} parent=1 // pred_check_branch
      %24 = sbr.rel (0) target = $region13
    $region12: #{node_embedding_model.1} parent=1 // pred_region
      _
    $region13: #{node_embedding_model.1} parent=1 // pred_fallthru
      _
    // Predicated region
    $region14: #{node_embedding_model.1} parent=1 // pred_check
      _
    $region15: #{node_embedding_model.1} parent=1 // pred_check_branch
      %26 = sbr.rel (0) target = $region17
    $region16: #{node_embedding_model.1} parent=1 // pred_region
      _
    $region17: #{node_embedding_model.1} parent=1 // pred_fallthru
      _
    // Predicated region
    $region18: #{node_embedding_model.1} parent=1 // pred_check
      _
    $region19: #{node_embedding_model.1} parent=1 // pred_check_branch
      %28 = sbr.rel (0) target = $region21
    $region20: #{node_embedding_model.1} parent=1 // pred_region
      _
    $region21: #{node_embedding_model.1} parent=1 // pred_fallthru
      _
    // Predicated region
    $region22: #{node_embedding_model.1} parent=1 // pred_check
      _
    $region23: #{node_embedding_model.1} parent=1 // pred_check_branch
      %30 = sbr.rel (0) target = $region25
    $region24: #{node_embedding_model.1} parent=1 // pred_region
      _
    $region25: #{node_embedding_model.1} parent=1 // pred_fallthru
      _
    // Predicated region
    $region26: #{node_embedding_model.1} parent=1 // pred_check
      _
    $region27: #{node_embedding_model.1} parent=1 // pred_check_branch
      %32 = sbr.rel (0) target = $region29
    $region28: #{node_embedding_model.1} parent=1 // pred_region
      _
    $region29: #{node_embedding_model.1} parent=1 // pred_fallthru
      _
    // Predicated region
    $region30: #{node_embedding_model.1} parent=1 // pred_check
      _
    $region31: #{node_embedding_model.1} parent=1 // pred_check_branch
      %34 = sbr.rel (0) target = $region33
    $region32: #{node_embedding_model.1} parent=1 // pred_region
      _
    $region33: #{node_embedding_model.1} parent=1 // pred_fallthru
      _
    // Predicated region
    $region34: #{node_embedding_model.1} parent=1 // pred_check
      _
    $region35: #{node_embedding_model.1} parent=1 // pred_check_branch
      %36 = sbr.rel (0) target = $region37
    $region36: #{node_embedding_model.1} parent=1 // pred_region
      _
    $region37: #{node_embedding_model.1} parent=1 // pred_fallthru
      _
    // Predicated region
    $region38: #{node_embedding_model.1} parent=1 // pred_check
      _
    $region39: #{node_embedding_model.1} parent=1 // pred_check_branch
      %38 = sbr.rel (0) target = $region41
    $region40: #{node_embedding_model.1} parent=1 // pred_region
      _
    $region41: #{node_embedding_model.1} parent=1 // pred_fallthru
      _
    // Predicated region
    $region42: #{node_embedding_model.1} parent=1 // pred_check
      _
    $region43: #{node_embedding_model.1} parent=1 // pred_check_branch
      %40 = sbr.rel (0) target = $region45
    $region44: #{node_embedding_model.1} parent=1 // pred_region
      _
    $region45: #{node_embedding_model.1} parent=1 // pred_fallthru
      _
    %v41 = vld [vmem:[%s0] sm:$0xff]
    %v42 = vld [vmem:[%s0 + $0x8] sm:$0xff]
    %v43 = vld [vmem:[%s0 + $0x10] sm:$0xff]
    %v44 = vld [vmem:[%s0 + $0x18] sm:$0xff]
    %v45 = vld [vmem:[%s0 + $0x20] sm:$0xff]
    %v46 = vld [vmem:[%s0 + $0x28] sm:$0xff]
    %v47 = vld [vmem:[%s0 + $0x30] sm:$0xff]
    %v48 = vld [vmem:[%s0 + $0x38] sm:$0xff]
    %v49 = vld [vmem:[%s0 + $0x40] sm:$0xff]
    %v50 = vld [vmem:[%s0 + $0x48] sm:$0xff]
    %v51 = vld [vmem:[%s0 + $0x50] sm:$0xff]
    %v52 = vld [vmem:[%s0 + $0x58] sm:$0xff]
    %v53 = vld [vmem:[%s0 + $0x60] sm:$0xff]
    %v54 = vld [vmem:[%s0 + $0x68] sm:$0xff]
    %v55 = vld [vmem:[%s0 + $0x70] sm:$0xff]
    %v56 = vld [vmem:[%s0 + $0x78] sm:$0xff]
    %v57 = vld [vmem:[%s1] sm:$0xff]
    %v58 = vld [vmem:[%s1 + $0x8] sm:$0xff]
    %v59 = vld [vmem:[%s2] sm:$0xff]
    %v60 = vld [vmem:[%s2 + $0x8] sm:$0xff]
    %62 = vset.pattern.permute.xlu0 0
    %63 = vperm.xlu0 %62, %v59
    %v64 = vpop.permute.xlu0 %63
    %67 = vset.pattern.permute.xlu0 0
    %68 = vperm.xlu0 %67, %v60
    %v69 = vpop.permute.xlu0 %68
    %vm71 = vcmask 64512
    %v73 = vsel %vm71, %v57, 0
    %v76 = vsel %vm71, %v58, 0
    %v79 = vsel %vm71, %v41, 0
    %v82 = vsel %vm71, %v42, 0
    %v85 = vsel %vm71, %v43, 0
    %v88 = vsel %vm71, %v44, 0
    %v91 = vsel %vm71, %v45, 0
    %v94 = vsel %vm71, %v46, 0
    %v97 = vsel %vm71, %v47, 0
    %v100 = vsel %vm71, %v48, 0
    %v103 = vsel %vm71, %v49, 0
    %v106 = vsel %vm71, %v50, 0
    %v109 = vsel %vm71, %v51, 0
    %v112 = vsel %vm71, %v52, 0
    %v115 = vsel %vm71, %v53, 0
    %v118 = vsel %vm71, %v54, 0
    %v121 = vsel %vm71, %v55, 0
    %v124 = vsel %vm71, %v56, 0
    %126 = vmatpush.xpose.msra.mxu0 %v124
    %127 = vmatpush.xpose.msra.mxu0 %v121
    %128 = vmatpush.xpose.msra.mxu0 %v118
    %129 = vmatpush.xpose.msra.mxu0 %v115
    %130 = vmatpush.xpose.msra.mxu0 %v112
    %131 = vmatpush.xpose.msra.mxu0 %v109
    %132 = vmatpush.xpose.msra.mxu0 %v106
    %133 = vmatpush.xpose.msra.mxu0 %v103
    %134 = vmatpush.xpose.msra.mxu0 %v100
    %135 = vmatpush.xpose.msra.mxu0 %v97
    %136 = vmatpush.xpose.msra.mxu0 %v94
    %137 = vmatpush.xpose.msra.mxu0 %v91
    %138 = vmatpush.xpose.msra.mxu0 %v88
    %139 = vmatpush.xpose.msra.mxu0 %v85
    %140 = vmatpush.xpose.msra.mxu0 %v82
    %141 = vmatpush.xpose.msra.mxu0 %v79
    %142 = vmatmul.f32.gmra.mxu0 %v73
    %v143 = vpop.f32.mrf.mxu0
    %v144 = vadd.f32 %v64, %v143
    %145 = vmatmul.f32.gmra.mxu0 %v76
    %v146 = vpop.f32.mrf.mxu0
    %v147 = vadd.f32 %v69, %v146
    %148 = vdwg.mxu0
    %v149 = vmax.f32 %v144, 0.0
    %v150 = vmax.f32 %v147, 0.0
    %v151 = vld [vmem:[%s3] sm:$0xff]
    %v152 = vld [vmem:[%s3 + $0x8] sm:$0xff]
    %v153 = vld [vmem:[%s3 + $0x10] sm:$0xff]
    %v154 = vld [vmem:[%s3 + $0x18] sm:$0xff]
    %v155 = vld [vmem:[%s4] sm:$0xff]
    %v156 = vld [vmem:[%s4 + $0x8] sm:$0xff]
    %v157 = vld [vmem:[%s4 + $0x10] sm:$0xff]
    %v158 = vld [vmem:[%s4 + $0x18] sm:$0xff]
    %160 = vset.pattern.permute.xlu0 0
    %161 = vperm.xlu0 %160, %v155
    %v162 = vpop.permute.xlu0 %161
    %165 = vset.pattern.permute.xlu0 0
    %166 = vperm.xlu0 %165, %v156
    %v167 = vpop.permute.xlu0 %166
    %170 = vset.pattern.permute.xlu0 0
    %171 = vperm.xlu0 %170, %v157
    %v172 = vpop.permute.xlu0 %171
    %175 = vset.pattern.permute.xlu0 0
    %176 = vperm.xlu0 %175, %v158
    %v177 = vpop.permute.xlu0 %176
    %vm179 = vcmask 130048
    %v181 = vsel %vm179, %v151, 0
    %v184 = vsel %vm179, %v152, 0
    %v187 = vsel %vm179, %v153, 0
    %v190 = vsel %vm179, %v154, 0
    %192 = vmatpush.msra.mxu0 0.0
    %193 = vmatpush.msra.mxu0 0.0
    %194 = vmatpush.msra.mxu0 0.0
    %195 = vmatpush.msra.mxu0 0.0
    %196 = vmatpush.msra.mxu0 0.0
    %197 = vmatpush.msra.mxu0 0.0
    %198 = vmatpush.msra.mxu0 0.0
    %199 = vmatpush.msra.mxu0 0.0
    %200 = vmatpush.msra.mxu0 0.0
    %201 = vmatpush.msra.mxu0 0.0
    %202 = vmatpush.msra.mxu0 0.0
    %203 = vmatpush.msra.mxu0 0.0
    %204 = vmatpush.msra.mxu0 0.0
    %205 = vmatpush.msra.mxu0 0.0
    %206 = vmatpush.msra.mxu0 %v150
    %207 = vmatpush.msra.mxu0 %v149
    %208 = vmatmul.f32.gmra.mxu0 %v181
    %v209 = vpop.f32.mrf.mxu0
    %v210 = vadd.f32 %v162, %v209
    %211 = vmatmul.f32.gmra.mxu0 %v184
    %v212 = vpop.f32.mrf.mxu0
    %v213 = vadd.f32 %v167, %v212
    %214 = vmatmul.f32.gmra.mxu0 %v187
    %v215 = vpop.f32.mrf.mxu0
    %v216 = vadd.f32 %v172, %v215
    %217 = vmatmul.f32.gmra.mxu0 %v190
    %v218 = vpop.f32.mrf.mxu0
    %v219 = vadd.f32 %v177, %v218
    %220 = vdwg.mxu0
    %v221 = vmax.f32 %v210, 0.0
    %v222 = vmax.f32 %v213, 0.0
    %v223 = vmax.f32 %v216, 0.0
    %v224 = vmax.f32 %v219, 0.0
    %v225 = vld [vmem:[%s5] sm:$0xff]
    %v226 = vld [vmem:[%s5 + $0x8] sm:$0xff]
    %v227 = vld [vmem:[%s5 + $0x10] sm:$0xff]
    %v228 = vld [vmem:[%s5 + $0x18] sm:$0xff]
    %v229 = vld [vmem:[%s5 + $0x20] sm:$0xff]
    %v230 = vld [vmem:[%s5 + $0x28] sm:$0xff]
    %v231 = vld [vmem:[%s5 + $0x30] sm:$0xff]
    %v232 = vld [vmem:[%s5 + $0x38] sm:$0xff]
    %v233 = vld [vmem:[%s6] sm:$0xff]
    %v234 = vld [vmem:[%s6 + $0x8] sm:$0xff]
    %v235 = vld [vmem:[%s6 + $0x10] sm:$0xff]
    %v236 = vld [vmem:[%s6 + $0x18] sm:$0xff]
    %v237 = vld [vmem:[%s6 + $0x20] sm:$0xff]
    %v238 = vld [vmem:[%s6 + $0x28] sm:$0xff]
    %v239 = vld [vmem:[%s6 + $0x30] sm:$0xff]
    %v240 = vld [vmem:[%s6 + $0x38] sm:$0xff]
    %242 = vset.pattern.permute.xlu0 0
    %243 = vperm.xlu0 %242, %v233
    %v244 = vpop.permute.xlu0 %243
    %247 = vset.pattern.permute.xlu0 0
    %248 = vperm.xlu0 %247, %v234
    %v249 = vpop.permute.xlu0 %248
    %252 = vset.pattern.permute.xlu0 0
    %253 = vperm.xlu0 %252, %v235
    %v254 = vpop.permute.xlu0 %253
    %257 = vset.pattern.permute.xlu0 0
    %258 = vperm.xlu0 %257, %v236
    %v259 = vpop.permute.xlu0 %258
    %262 = vset.pattern.permute.xlu0 0
    %263 = vperm.xlu0 %262, %v237
    %v264 = vpop.permute.xlu0 %263
    %267 = vset.pattern.permute.xlu0 0
    %268 = vperm.xlu0 %267, %v238
    %v269 = vpop.permute.xlu0 %268
    %272 = vset.pattern.permute.xlu0 0
    %273 = vperm.xlu0 %272, %v239
    %v274 = vpop.permute.xlu0 %273
    %277 = vset.pattern.permute.xlu0 0
    %278 = vperm.xlu0 %277, %v240
    %v279 = vpop.permute.xlu0 %278
    %vm281 = vcmask 261120
    %v283 = vsel %vm281, %v225, 0
    %v286 = vsel %vm281, %v226, 0
    %v289 = vsel %vm281, %v227, 0
    %v292 = vsel %vm281, %v228, 0
    %v295 = vsel %vm281, %v229, 0
    %v298 = vsel %vm281, %v230, 0
    %v301 = vsel %vm281, %v231, 0
    %v304 = vsel %vm281, %v232, 0
    %306 = vmatpush.msra.mxu0 0.0
    %307 = vmatpush.msra.mxu0 0.0
    %308 = vmatpush.msra.mxu0 0.0
    %309 = vmatpush.msra.mxu0 0.0
    %310 = vmatpush.msra.mxu0 0.0
    %311 = vmatpush.msra.mxu0 0.0
    %312 = vmatpush.msra.mxu0 0.0
    %313 = vmatpush.msra.mxu0 0.0
    %314 = vmatpush.msra.mxu0 0.0
    %315 = vmatpush.msra.mxu0 0.0
    %316 = vmatpush.msra.mxu0 0.0
    %317 = vmatpush.msra.mxu0 0.0
    %318 = vmatpush.msra.mxu0 %v224
    %319 = vmatpush.msra.mxu0 %v223
    %320 = vmatpush.msra.mxu0 %v222
    %321 = vmatpush.msra.mxu0 %v221
    %322 = vmatmul.f32.gmra.mxu0 %v283
    %v323 = vpop.f32.mrf.mxu0
    %v324 = vadd.f32 %v244, %v323
    %325 = vmatmul.f32.gmra.mxu0 %v286
    %v326 = vpop.f32.mrf.mxu0
    %v327 = vadd.f32 %v249, %v326
    %328 = vmatmul.f32.gmra.mxu0 %v289
    %v329 = vpop.f32.mrf.mxu0
    %v330 = vadd.f32 %v254, %v329
    %331 = vmatmul.f32.gmra.mxu0 %v292
    %v332 = vpop.f32.mrf.mxu0
    %v333 = vadd.f32 %v259, %v332
    %334 = vmatmul.f32.gmra.mxu0 %v295
    %v335 = vpop.f32.mrf.mxu0
    %v336 = vadd.f32 %v264, %v335
    %337 = vmatmul.f32.gmra.mxu0 %v298
    %v338 = vpop.f32.mrf.mxu0
    %v339 = vadd.f32 %v269, %v338
    %340 = vmatmul.f32.gmra.mxu0 %v301
    %v341 = vpop.f32.mrf.mxu0
    %v342 = vadd.f32 %v274, %v341
    %343 = vmatmul.f32.gmra.mxu0 %v304
    %v344 = vpop.f32.mrf.mxu0
    %v345 = vadd.f32 %v279, %v344
    %346 = vdwg.mxu0
    %v347 = vmax.f32 %v324, 0.0
    %v348 = vmax.f32 %v327, 0.0
    %v349 = vmax.f32 %v330, 0.0
    %v350 = vmax.f32 %v333, 0.0
    %v351 = vmax.f32 %v336, 0.0
    %v352 = vmax.f32 %v339, 0.0
    %v353 = vmax.f32 %v342, 0.0
    %v354 = vmax.f32 %v345, 0.0
    %v355 = vld [vmem:[%s7] sm:$0xff]
    %v356 = vld [vmem:[%s7 + $0x8] sm:$0xff]
    %v357 = vld [vmem:[%s7 + $0x10] sm:$0xff]
    %v358 = vld [vmem:[%s7 + $0x18] sm:$0xff]
    %v359 = vld [vmem:[%s7 + $0x20] sm:$0xff]
    %v360 = vld [vmem:[%s7 + $0x28] sm:$0xff]
    %v361 = vld [vmem:[%s7 + $0x30] sm:$0xff]
    %v362 = vld [vmem:[%s7 + $0x38] sm:$0xff]
    %v363 = vld [vmem:[%s7 + $0x40] sm:$0xff]
    %v364 = vld [vmem:[%s7 + $0x48] sm:$0xff]
    %v365 = vld [vmem:[%s7 + $0x50] sm:$0xff]
    %v366 = vld [vmem:[%s7 + $0x58] sm:$0xff]
    %v367 = vld [vmem:[%s7 + $0x60] sm:$0xff]
    %v368 = vld [vmem:[%s7 + $0x68] sm:$0xff]
    %v369 = vld [vmem:[%s7 + $0x70] sm:$0xff]
    %v370 = vld [vmem:[%s7 + $0x78] sm:$0xff]
    %v371 = vld [vmem:[%s8] sm:$0xff]
    %v372 = vld [vmem:[%s8 + $0x8] sm:$0xff]
    %v373 = vld [vmem:[%s8 + $0x10] sm:$0xff]
    %v374 = vld [vmem:[%s8 + $0x18] sm:$0xff]
    %v375 = vld [vmem:[%s8 + $0x20] sm:$0xff]
    %v376 = vld [vmem:[%s8 + $0x28] sm:$0xff]
    %v377 = vld [vmem:[%s8 + $0x30] sm:$0xff]
    %v378 = vld [vmem:[%s8 + $0x38] sm:$0xff]
    %v379 = vld [vmem:[%s8 + $0x40] sm:$0xff]
    %v380 = vld [vmem:[%s8 + $0x48] sm:$0xff]
    %v381 = vld [vmem:[%s8 + $0x50] sm:$0xff]
    %v382 = vld [vmem:[%s8 + $0x58] sm:$0xff]
    %v383 = vld [vmem:[%s8 + $0x60] sm:$0xff]
    %v384 = vld [vmem:[%s8 + $0x68] sm:$0xff]
    %v385 = vld [vmem:[%s8 + $0x70] sm:$0xff]
    %v386 = vld [vmem:[%s8 + $0x78] sm:$0xff]
    %388 = vset.pattern.permute.xlu0 0
    %389 = vperm.xlu0 %388, %v371
    %v390 = vpop.permute.xlu0 %389
    %393 = vset.pattern.permute.xlu0 0
    %394 = vperm.xlu0 %393, %v372
    %v395 = vpop.permute.xlu0 %394
    %398 = vset.pattern.permute.xlu0 0
    %399 = vperm.xlu0 %398, %v373
    %v400 = vpop.permute.xlu0 %399
    %403 = vset.pattern.permute.xlu0 0
    %404 = vperm.xlu0 %403, %v374
    %v405 = vpop.permute.xlu0 %404
    %408 = vset.pattern.permute.xlu0 0
    %409 = vperm.xlu0 %408, %v375
    %v410 = vpop.permute.xlu0 %409
    %413 = vset.pattern.permute.xlu0 0
    %414 = vperm.xlu0 %413, %v376
    %v415 = vpop.permute.xlu0 %414
    %418 = vset.pattern.permute.xlu0 0
    %419 = vperm.xlu0 %418, %v377
    %v420 = vpop.permute.xlu0 %419
    %423 = vset.pattern.permute.xlu0 0
    %424 = vperm.xlu0 %423, %v378
    %v425 = vpop.permute.xlu0 %424
    %428 = vset.pattern.permute.xlu0 0
    %429 = vperm.xlu0 %428, %v379
    %v430 = vpop.permute.xlu0 %429
    %433 = vset.pattern.permute.xlu0 0
    %434 = vperm.xlu0 %433, %v380
    %v435 = vpop.permute.xlu0 %434
    %438 = vset.pattern.permute.xlu0 0
    %439 = vperm.xlu0 %438, %v381
    %v440 = vpop.permute.xlu0 %439
    %443 = vset.pattern.permute.xlu0 0
    %444 = vperm.xlu0 %443, %v382
    %v445 = vpop.permute.xlu0 %444
    %448 = vset.pattern.permute.xlu0 0
    %449 = vperm.xlu0 %448, %v383
    %v450 = vpop.permute.xlu0 %449
    %453 = vset.pattern.permute.xlu0 0
    %454 = vperm.xlu0 %453, %v384
    %v455 = vpop.permute.xlu0 %454
    %458 = vset.pattern.permute.xlu0 0
    %459 = vperm.xlu0 %458, %v385
    %v460 = vpop.permute.xlu0 %459
    %463 = vset.pattern.permute.xlu0 0
    %464 = vperm.xlu0 %463, %v386
    %v465 = vpop.permute.xlu0 %464
    %vm467 = vcmask 523264
    %v469 = vsel %vm467, %v355, 0
    %v472 = vsel %vm467, %v356, 0
    %v475 = vsel %vm467, %v357, 0
    %v478 = vsel %vm467, %v358, 0
    %v481 = vsel %vm467, %v359, 0
    %v484 = vsel %vm467, %v360, 0
    %v487 = vsel %vm467, %v361, 0
    %v490 = vsel %vm467, %v362, 0
    %v493 = vsel %vm467, %v363, 0
    %v496 = vsel %vm467, %v364, 0
    %v499 = vsel %vm467, %v365, 0
    %v502 = vsel %vm467, %v366, 0
    %v505 = vsel %vm467, %v367, 0
    %v508 = vsel %vm467, %v368, 0
    %v511 = vsel %vm467, %v369, 0
    %v514 = vsel %vm467, %v370, 0
    %516 = vmatpush.msra.mxu0 0.0
    %517 = vmatpush.msra.mxu0 0.0
    %518 = vmatpush.msra.mxu0 0.0
    %519 = vmatpush.msra.mxu0 0.0
    %520 = vmatpush.msra.mxu0 0.0
    %521 = vmatpush.msra.mxu0 0.0
    %522 = vmatpush.msra.mxu0 0.0
    %523 = vmatpush.msra.mxu0 0.0
    %524 = vmatpush.msra.mxu0 %v354
    %525 = vmatpush.msra.mxu0 %v353
    %526 = vmatpush.msra.mxu0 %v352
    %527 = vmatpush.msra.mxu0 %v351
    %528 = vmatpush.msra.mxu0 %v350
    %529 = vmatpush.msra.mxu0 %v349
    %530 = vmatpush.msra.mxu0 %v348
    %531 = vmatpush.msra.mxu0 %v347
    %532 = vmatmul.f32.gmra.mxu0 %v469
    %v533 = vpop.f32.mrf.mxu0
    %v534 = vadd.f32 %v390, %v533
    %535 = vmatmul.f32.gmra.mxu0 %v472
    %v536 = vpop.f32.mrf.mxu0
    %v537 = vadd.f32 %v395, %v536
    %538 = vmatmul.f32.gmra.mxu0 %v475
    %v539 = vpop.f32.mrf.mxu0
    %v540 = vadd.f32 %v400, %v539
    %541 = vmatmul.f32.gmra.mxu0 %v478
    %v542 = vpop.f32.mrf.mxu0
    %v543 = vadd.f32 %v405, %v542
    %544 = vmatmul.f32.gmra.mxu0 %v481
    %v545 = vpop.f32.mrf.mxu0
    %v546 = vadd.f32 %v410, %v545
    %547 = vmatmul.f32.gmra.mxu0 %v484
    %v548 = vpop.f32.mrf.mxu0
    %v549 = vadd.f32 %v415, %v548
    %550 = vmatmul.f32.gmra.mxu0 %v487
    %v551 = vpop.f32.mrf.mxu0
    %v552 = vadd.f32 %v420, %v551
    %553 = vmatmul.f32.gmra.mxu0 %v490
    %v554 = vpop.f32.mrf.mxu0
    %v555 = vadd.f32 %v425, %v554
    %556 = vmatmul.f32.gmra.mxu0 %v493
    %v557 = vpop.f32.mrf.mxu0
    %v558 = vadd.f32 %v430, %v557
    %559 = vmatmul.f32.gmra.mxu0 %v496
    %v560 = vpop.f32.mrf.mxu0
    %v561 = vadd.f32 %v435, %v560
    %562 = vmatmul.f32.gmra.mxu0 %v499
    %v563 = vpop.f32.mrf.mxu0
    %v564 = vadd.f32 %v440, %v563
    %565 = vmatmul.f32.gmra.mxu0 %v502
    %v566 = vpop.f32.mrf.mxu0
    %v567 = vadd.f32 %v445, %v566
    %568 = vmatmul.f32.gmra.mxu0 %v505
    %v569 = vpop.f32.mrf.mxu0
    %v570 = vadd.f32 %v450, %v569
    %571 = vmatmul.f32.gmra.mxu0 %v508
    %v572 = vpop.f32.mrf.mxu0
    %v573 = vadd.f32 %v455, %v572
    %574 = vmatmul.f32.gmra.mxu0 %v511
    %v575 = vpop.f32.mrf.mxu0
    %v576 = vadd.f32 %v460, %v575
    %577 = vmatmul.f32.gmra.mxu0 %v514
    %v578 = vpop.f32.mrf.mxu0
    %v579 = vadd.f32 %v465, %v578
    %580 = vdwg.mxu0
    %v581 = vmax.f32 %v534, 0.0
    %v582 = vmax.f32 %v537, 0.0
    %v583 = vmax.f32 %v540, 0.0
    %v584 = vmax.f32 %v543, 0.0
    %v585 = vmax.f32 %v546, 0.0
    %v586 = vmax.f32 %v549, 0.0
    %v587 = vmax.f32 %v552, 0.0
    %v588 = vmax.f32 %v555, 0.0
    %v589 = vmax.f32 %v558, 0.0
    %v590 = vmax.f32 %v561, 0.0
    %v591 = vmax.f32 %v564, 0.0
    %v592 = vmax.f32 %v567, 0.0
    %v593 = vmax.f32 %v570, 0.0
    %v594 = vmax.f32 %v573, 0.0
    %v595 = vmax.f32 %v576, 0.0
    %v596 = vmax.f32 %v579, 0.0
    %v597 = vld [vmem:[%s9] sm:$0x1]
    %v598 = vld [vmem:[#allocation2] sm:$0x1]
    %600 = vset.pattern.permute.xlu0 0
    %601 = vperm.xlu0 %600, %v598
    %v602 = vpop.permute.xlu0 %601
    %v604 = vperm.slane %v602, 0
    %605 = vmatpush.msra.mxu0 %v596
    %606 = vmatpush.msra.mxu0 %v595
    %607 = vmatpush.msra.mxu0 %v594
    %608 = vmatpush.msra.mxu0 %v593
    %609 = vmatpush.msra.mxu0 %v592
    %610 = vmatpush.msra.mxu0 %v591
    %611 = vmatpush.msra.mxu0 %v590
    %612 = vmatpush.msra.mxu0 %v589
    %613 = vmatpush.msra.mxu0 %v588
    %614 = vmatpush.msra.mxu0 %v587
    %615 = vmatpush.msra.mxu0 %v586
    %616 = vmatpush.msra.mxu0 %v585
    %617 = vmatpush.msra.mxu0 %v584
    %618 = vmatpush.msra.mxu0 %v583
    %619 = vmatpush.msra.mxu0 %v582
    %620 = vmatpush.msra.mxu0 %v581
    %621 = vmatmul.f32.gmra.mxu0 %v597
    %v622 = vpop.f32.mrf.mxu0
    %v623 = vadd.f32 %v604, %v622
    %624 = vdwg.mxu0
    %625 = vst [vmem:[#allocation3] sm:$0x1] %v623
    // Predicated region
    $region46: #{node_embedding_model.1} parent=1 // pred_check
      _
    $region47: #{node_embedding_model.1} parent=1 // pred_check_branch
      %627 = sbr.rel (0) target = $region49
    $region48: #{node_embedding_model.1} parent=1 // pred_region
      %629 = vsyncadd [#allocation4], 0
      %s631 = sshll.u32 [#allocation3], 4
      %s632 = int_to_ptr.vmem [resolvable:$true] %s631
      %s633 = sshll.u32 %s11, 4
      %s634 = int_to_ptr.hbm [resolvable:$true] %s633
      %636 = dma.vmem_to_hbm [thread:$0]  %s632, 16, %s634, [#allocation4]
    $region49: #{node_embedding_model.1} parent=1 // pred_fallthru
      _
    // Predicated region
    $region50: #{node_embedding_model.1} parent=1 // pred_check
      _
    $region51: #{node_embedding_model.1} parent=1 // pred_check_branch
      %638 = sbr.rel (0) target = $region53
    $region52: #{node_embedding_model.1} parent=1 // pred_region
      %640 = dma.done [#allocation4], 16
    $region53: #{node_embedding_model.1} parent=1 // pred_fallthru
      _
    %641 = vsyncpa [#allocation4], 1

</llo_original>
